<compile_context>
chip_gen: v7x
topology: tpu7x:2x2x1
jax: 0.10.0
libtpu: 0.0.40
codegen_flags: <defaults>
</compile_context>

<pallas_src>
import jax
import jax.numpy as jnp
from jax.experimental import pallas as pl
from jax.experimental.pallas import tpu as pltpu


def _trans_block_kernel(x_ref, params_ref, w_ref, s_ref, o_ref):
    # x_ref:      (1, Cin, Pin)    Pin = 2*Rh*W input pixels of one image
    # params_ref: (2, Cin, 1)      row 0: BN scale, row 1: BN shift
    # w_ref:      (Cout, Cin)      1x1 conv weight (pre-scaled by 1/4)
    # s_ref:      (Pin, Pout)      0/1 avg-pool gather matrix, Pout = Rh*Wo
    # o_ref:      (1, Cout, Pout)  pooled conv output (channels, pixels)
    x = x_ref[0].astype(jnp.float32)               # (Cin, Pin)
    scale = params_ref[0].astype(jnp.float32)      # (Cin, 1) lane-broadcast
    shift = params_ref[1].astype(jnp.float32)
    h = jnp.maximum(x * scale + shift, 0.0)        # BN affine + ReLU (VPU)

    # 2x2 average pool over the pixel (lane) axis as a single MXU matmul
    # (the 1/4 normalization lives in w_ref).
    pooled = jnp.dot(h.astype(s_ref.dtype), s_ref[...],
                     preferred_element_type=jnp.float32)          # (Cin, Pout)

    # 1x1 conv == channel-mixing matmul, computed transposed so the stored
    # minor dim is the wide pixel axis (lane-dense vst even for small Cout).
    y = jnp.dot(w_ref[...], pooled.astype(w_ref.dtype),
                preferred_element_type=jnp.float32)               # (Cout, Pout)
    o_ref[0] = y.astype(o_ref.dtype)


def _choose_row_block(N, Ho, Wo, Cin, Cout, budget_bytes=24 << 20):
    """Largest divisor Rh of Ho whose double-buffered input+output blocks plus
    the resident pooling matrix / params / weight fit the VMEM budget; prefers
    a lane-dense output block (Rh*Wo >= 128) and >= 4 grid steps when possible."""
    W = 2 * Wo
    pad = lambda v, m: -(-v // m) * m

    def footprint(d):
        pin, pout = 2 * d * W, d * Wo
        f = pad(Cin, 8) * pad(pin, 128) * 4 * 2        # input block (double-buffered)
        f += pad(Cout, 8) * pad(pout, 128) * 4 * 2     # output block (double-buffered)
        f += pad(pin, 8) * pad(pout, 128) * 4 * 2      # pooling matrix (resident)
        f += (2 * pad(Cin, 8) * 128 + pad(Cout, 8) * pad(Cin, 128)) * 4 * 2  # params+w
        return f

    cands = [d for d in range(1, Ho + 1)
             if Ho % d == 0 and (d == Ho or (d * Wo) % 128 == 0)]
    fit = [d for d in cands if footprint(d) <= budget_bytes] or [min(cands)]
    # TODO(synk): if even the smallest row block exceeds the budget, the block
    #             should additionally split along W (not needed at DenseNet sizes).
    lane_ok = [d for d in fit if d * Wo >= 128] or fit
    multi = [d for d in lane_ok if N * (Ho // d) >= 4] or lane_ok
    return max(multi)


def ten_transition_block(x_nchw, bn_gamma, bn_beta, conv_w, eps=1e-5,
                         matmul_dtype=jnp.float32):
    """Forward of TenTransitionBlock (training-mode BN, dropRate=0.0)."""
    N, Cin, H, W = x_nchw.shape
    Cout = conv_w.shape[0]
    assert H % 2 == 0 and W % 2 == 0  # PyTorch avg_pool2d(2) would floor odd sizes
    Ho, Wo = H // 2, W // 2

    # FREE row-major view of NCHW; used both for the stats pass and the kernel.
    x3 = x_nchw.reshape(N, Cin, H * W)

    # Training-mode BN: biased batch stats over (N, H, W), computed with one
    # fused sum / sum-of-squares pass, folded into per-channel scale / shift.
    cnt = N * H * W
    s1 = jnp.sum(x3, axis=(0, 2), dtype=jnp.float32)
    s2 = jnp.sum(jnp.square(x3), axis=(0, 2), dtype=jnp.float32)
    mean = s1 / cnt
    var = jnp.maximum(s2 / cnt - mean * mean, 0.0)
    scale = bn_gamma.astype(jnp.float32) * jax.lax.rsqrt(var + eps)
    shift = bn_beta.astype(jnp.float32) - mean * scale
    params = jnp.stack([scale, shift]).reshape(2, Cin, 1)

    # 1x1 conv weight as a (Cout, Cin) channel-mixing matrix, pool's 1/4 folded in.
    w_mat = (conv_w.reshape(Cout, Cin) * 0.25).astype(matmul_dtype)

    Rh = _choose_row_block(N, Ho, Wo, Cin, Cout)
    Pin, Pout = 2 * Rh * W, Rh * Wo

    # Constant 0/1 pooling matrix: input pixel (hi, wi) of a row block feeds
    # output pixel (hi//2, wi//2).
    ii = jnp.arange(Pin)
    mapped = (ii // W // 2) * Wo + (ii % W) // 2
    pool_mat = (mapped[:, None] == jnp.arange(Pout)[None, :]).astype(matmul_dtype)

    grid = (N, Ho // Rh)
    out = pl.pallas_call(
        _trans_block_kernel,
        out_shape=jax.ShapeDtypeStruct((N, Cout, Ho * Wo), jnp.float32),
        grid=grid,
        in_specs=[
            pl.BlockSpec((1, Cin, Pin), lambda n, r: (n, 0, r)),
            pl.BlockSpec((2, Cin, 1), lambda n, r: (0, 0, 0)),
            pl.BlockSpec((Cout, Cin), lambda n, r: (0, 0)),
            pl.BlockSpec((Pin, Pout), lambda n, r: (0, 0)),
        ],
        out_specs=pl.BlockSpec((1, Cout, Pout), lambda n, r: (n, 0, r)),
        compiler_params=pltpu.CompilerParams(
            dimension_semantics=("parallel", "parallel"),
            vmem_limit_bytes=48 * 1024 * 1024),
    )(x3, params, w_mat, pool_mat)

    # The (N, Cout, Ho*Wo) slab IS the NCHW output; this reshape is free.
    return out.reshape(N, Cout, Ho, Wo)


def _reference(x_nchw, bn_gamma, bn_beta, conv_w, eps=1e-5):
    """Pure-JAX reference mirroring the PyTorch forward (training-mode BN)."""
    N, Cin, H, W = x_nchw.shape
    Cout = conv_w.shape[0]
    mean = jnp.mean(x_nchw, axis=(0, 2, 3))
    var = jnp.var(x_nchw, axis=(0, 2, 3))
    xn = (x_nchw - mean[None, :, None, None]) / jnp.sqrt(var + eps)[None, :, None, None]
    xn = xn * bn_gamma[None, :, None, None] + bn_beta[None, :, None, None]
    h = jnp.maximum(xn, 0.0)
    w = conv_w.reshape(Cout, Cin)
    out = jnp.einsum('nchw,oc->nohw', h, w)                  # 1x1 conv, no bias
    out = out.reshape(N, Cout, H // 2, 2, W // 2, 2).mean(axis=(3, 5))
    return out


if __name__ == "__main__":
    key = jax.random.PRNGKey(0)
    k_x, k_g, k_b, k_w = jax.random.split(key, 4)

    N, Cin, H, W = 2, 8, 16, 16     # in_planes=8
    Cout = 4                        # out_planes=4

    x = jax.random.normal(k_x, (N, Cin, H, W), dtype=jnp.float32)
    bn_gamma = 1.0 + 0.1 * jax.random.normal(k_g, (Cin,), dtype=jnp.float32)
    bn_beta = 0.05 * jax.random.normal(k_b, (Cin,), dtype=jnp.float32)
    # nn.Conv2d default init ~ kaiming-uniform; any deterministic values suffice.
    conv_w = (jax.random.normal(k_w, (Cout, Cin, 1, 1), dtype=jnp.float32)
              / jnp.sqrt(Cin))

    out = ten_transition_block(x, bn_gamma, bn_beta, conv_w)
    out = jax.block_until_ready(out)

    ref = _reference(x, bn_gamma, bn_beta, conv_w)
    assert out.shape == (N, Cout, H // 2, W // 2), out.shape
    assert jnp.allclose(out, ref, rtol=1e-4, atol=1e-4), (
        float(jnp.max(jnp.abs(out - ref))))

    print("KERNEL_OK")
</pallas_src>

<mosaic_0001>
module attributes {stable_mosaic.version = 11 : i64} {
  func.func @_trans_block_kernel(%arg0: i32, %arg1: i32, %arg2: memref<1x8x256xf32, #tpu.memory_space<vmem>>, %arg3: memref<2x8x1xf32, #tpu.memory_space<vmem>>, %arg4: memref<4x8xf32, #tpu.memory_space<vmem>>, %arg5: memref<256x64xf32, #tpu.memory_space<vmem>>, %arg6: memref<1x4x64xf32, #tpu.memory_space<vmem>>) attributes {dimension_semantics = [#tpu.dimension_semantics<parallel>, #tpu.dimension_semantics<parallel>], iteration_bounds = array<i64: 2, 1>, scalar_prefetch = 0 : i64, scratch_operands = 0 : i64, tpu.core_type = #tpu.core_type<tc>, window_params = [{transform_indices = @transform_0, window_bounds = array<i64: 1, 8, 256>}, {pipeline_mode = #tpu.pipeline_mode<synchronous>, transform_indices = @transform_1, window_bounds = array<i64: 2, 8, 1>}, {pipeline_mode = #tpu.pipeline_mode<synchronous>, transform_indices = @transform_2, window_bounds = array<i64: 4, 8>}, {pipeline_mode = #tpu.pipeline_mode<synchronous>, transform_indices = @transform_3, window_bounds = array<i64: 256, 64>}, {transform_indices = @transform_4, window_bounds = array<i64: 1, 4, 64>}]} {
    %c0 = arith.constant 0 : index
    %c0_0 = arith.constant 0 : index
    %c0_1 = arith.constant 0 : index
    %0 = vector.load %arg2[%c0, %c0_0, %c0_1] : memref<1x8x256xf32, #tpu.memory_space<vmem>>, vector<1x8x256xf32>
    %1 = vector.shape_cast %0 : vector<1x8x256xf32> to vector<8x256xf32>
    %c0_2 = arith.constant 0 : index
    %c0_3 = arith.constant 0 : index
    %c0_4 = arith.constant 0 : index
    %2 = vector.load %arg3[%c0_2, %c0_3, %c0_4] : memref<2x8x1xf32, #tpu.memory_space<vmem>>, vector<1x8x1xf32>
    %3 = vector.shape_cast %2 : vector<1x8x1xf32> to vector<8x1xf32>
    %c1 = arith.constant 1 : index
    %c0_5 = arith.constant 0 : index
    %c0_6 = arith.constant 0 : index
    %4 = vector.load %arg3[%c1, %c0_5, %c0_6] : memref<2x8x1xf32, #tpu.memory_space<vmem>>, vector<1x8x1xf32>
    %5 = vector.shape_cast %4 : vector<1x8x1xf32> to vector<8x1xf32>
    %6 = vector.broadcast %3 : vector<8x1xf32> to vector<8x256xf32>
    %7 = arith.mulf %1, %6 : vector<8x256xf32>
    %8 = vector.broadcast %5 : vector<8x1xf32> to vector<8x256xf32>
    %9 = arith.addf %7, %8 : vector<8x256xf32>
    %cst = arith.constant 0.000000e+00 : f32
    %10 = vector.broadcast %cst : f32 to vector<8x256xf32>
    %11 = arith.maximumf %9, %10 : vector<8x256xf32>
    %c0_7 = arith.constant 0 : index
    %c0_8 = arith.constant 0 : index
    %12 = vector.load %arg5[%c0_7, %c0_8] : memref<256x64xf32, #tpu.memory_space<vmem>>, vector<256x64xf32>
    %cst_9 = arith.constant dense<0.000000e+00> : vector<8x64xf32>
    %13 = tpu.matmul %11, %12, %cst_9 {dimension_numbers = #tpu.dot_dimension_numbers<[1], [0], [0], [1], [0, 0, 1, 1], [], []>} : vector<8x256xf32>, vector<256x64xf32>, vector<8x64xf32> -> vector<8x64xf32>
    %c0_10 = arith.constant 0 : index
    %c0_11 = arith.constant 0 : index
    %14 = vector.load %arg4[%c0_10, %c0_11] : memref<4x8xf32, #tpu.memory_space<vmem>>, vector<4x8xf32>
    %cst_12 = arith.constant dense<0.000000e+00> : vector<4x64xf32>
    %15 = tpu.matmul %14, %13, %cst_12 {dimension_numbers = #tpu.dot_dimension_numbers<[1], [0], [0], [1], [0, 0, 1, 1], [], []>} : vector<4x8xf32>, vector<8x64xf32>, vector<4x64xf32> -> vector<4x64xf32>
    %c0_13 = arith.constant 0 : index
    %c0_14 = arith.constant 0 : index
    %c0_15 = arith.constant 0 : index
    %16 = vector.load %arg6[%c0_13, %c0_14, %c0_15] : memref<1x4x64xf32, #tpu.memory_space<vmem>>, vector<1x4x64xf32>
    %17 = vector.shape_cast %16 : vector<1x4x64xf32> to vector<4x64xf32>
    %18 = vector.shape_cast %15 : vector<4x64xf32> to vector<1x4x64xf32>
    tpu.vector_store %arg6[%c0_13, %c0_14, %c0_15], %18 {strides = array<i32>} : memref<1x4x64xf32, #tpu.memory_space<vmem>>, vector<1x4x64xf32>,
    return
  }
  func.func @transform_0(%arg0: i32, %arg1: i32) -> (i32, i32, i32) {
    %c0_i32 = arith.constant 0 : i32
    %c0_i32_0 = arith.constant 0 : i32
    return %arg0, %c0_i32, %arg1 : i32, i32, i32
  }
  func.func @transform_1(%arg0: i32, %arg1: i32) -> (i32, i32, i32) {
    %c0_i32 = arith.constant 0 : i32
    %c0_i32_0 = arith.constant 0 : i32
    %c0_i32_1 = arith.constant 0 : i32
    %c0_i32_2 = arith.constant 0 : i32
    return %c0_i32, %c0_i32_0, %c0_i32_1 : i32, i32, i32
  }
  func.func @transform_2(%arg0: i32, %arg1: i32) -> (i32, i32) {
    %c0_i32 = arith.constant 0 : i32
    %c0_i32_0 = arith.constant 0 : i32
    %c0_i32_1 = arith.constant 0 : i32
    return %c0_i32, %c0_i32_0 : i32, i32
  }
  func.func @transform_3(%arg0: i32, %arg1: i32) -> (i32, i32) {
    %c0_i32 = arith.constant 0 : i32
    %c0_i32_0 = arith.constant 0 : i32
    %c0_i32_1 = arith.constant 0 : i32
    return %c0_i32, %c0_i32_0 : i32, i32
  }
  func.func @transform_4(%arg0: i32, %arg1: i32) -> (i32, i32, i32) {
    %c0_i32 = arith.constant 0 : i32
    %c0_i32_0 = arith.constant 0 : i32
    return %arg0, %c0_i32, %arg1 : i32, i32, i32
  }
}

</mosaic_0001>

<llo_original>
// kernel: tpu_custom_call.1
$region0: #{tpu_custom_call.1}
  #allocation0 [shape = 'u32[]', space=smem, size = 0x4, offset = 0x4, fixed_abs, tag = 'smem constant byte address 0x4 - core index']
  #allocation1 [shape = 'u32[144,128]{1,0:T(1,128)}', space=vmem, size = 0x12000, scoped, tag = 'internal scratch']
  %s0 = inlined_call_operand.vmem [shape: f32[2,8,256], index: 0, kind: input, shape index: {}]
  %s1 = inlined_call_operand.vmem [shape: f32[2,8,1], index: 1, kind: input, shape index: {}]
  %s2 = inlined_call_operand.vmem [shape: f32[4,8], index: 2, kind: input, shape index: {}]
  %s3 = inlined_call_operand.vmem [shape: f32[256,64], index: 3, kind: input, shape index: {}]
  %s4 = inlined_call_operand.hbm [shape: f32[2,4,64], index: 4, kind: output, shape index: {}]
  %s5 = sld [smem:[#allocation0]]
  $region49: #{tpu_custom_call.1} parent=0
    _
  %s7 = ssub.s32 1, %s5
  %s8 = scalar_select 0, %s7, %s5
  $region1: #{tpu_custom_call.1} parent=0
    #allocation2 [shape = 'u8[4096]{0}', space=vmem, size = 0x1000, scoped, tag = 'output window, operand 0']
    #allocation3 [shape = 's32[2]{0}', space=sflag, size = 0x8, scoped, tag = 'scoped memory for tpu_custom_call.1']
    %9 = vsyncpa [#allocation3], 0
    %s10 = scalar_lea.sflag [#allocation3], 1
    %11 = vsyncpa %s10, 0
    loop: start=0, step=1, limit=4
    $region2: #{tpu_custom_call.1} parent=1 // loop_pre_header
      _
    $region3: #{tpu_custom_call.1} parent=1 // loop_header
      %s13 = sphi 0, %s17
      %p14 = scmp.ge.s32.totalorder %s13, 4
      %s20 = sphi 0, %s32
      %s21 = sphi 0, %s28
      %s22 = sphi 0, %s20
      %s23 = sphi 0, %s21
      %s24 = sphi 0, %s22
      %s25 = sphi 0, %s23
      %s37 = sphi 0, %s39
      %s40 = sphi 0, %s37
      %s41 = sphi 0, %s40
      %s57 = sphi 0, %s41
      %s61 = sphi 0, %s61
      %s63 = sphi 0, %s61
      %s64 = sphi 0, %s63
      %s78 = sphi 0, %s64
      %s82 = sphi 0, %s82
      %s84 = sphi 0, %s82
      %s85 = sphi 0, %s84
      %s99 = sphi 0, %s85
      %s103 = sphi 0, %s103
      %s105 = sphi 0, %s103
      %s106 = sphi 0, %s105
      %s120 = sphi 0, %s106
      %s128 = sphi 0, %s130
      %s131 = sphi 0, %s128
      %s132 = sphi 0, %s131
      %s148 = sphi 0, %s132
    $region4: #{tpu_custom_call.1} parent=1 // loop_header_branch
      %16 = sbr.rel (%p14) target = $region8
    $region5: #{tpu_custom_call.1} parent=1 // loop_body
      %s18 = ssub.s32 %s13, 1
      %s19 = ssub.s32 %s13, 2
      %s26 = sadd.s32 1, %s21
      %p27 = scmp.ge.s32.totalorder %s26, 1
      %s28 = scalar_select %p27, 0, %s26
      %s29 = sadd.s32 1, %s20
      %s30 = scalar_select %p27, %s29, %s20
      %p31 = scmp.ge.s32.totalorder %s30, 2
      %s32 = scalar_select %p31, 0, %s30
      %s33 = ssub.s32 %s20, %s32
      %s34 = ssub.s32 %s21, %s28
      %s35 = sor.u32 %s33, %s34
      %p36 = scmp.eq.s32.totalorder %s35, 0
      %s38 = sadd.s32 %s37, 1
      %s39 = scalar_select %p36, %s37, %s38
      %p42 = pneg %p36
      %p43 = scmp.eq.s32.totalorder %s13, 1
      %p44 = por %p42, %p43
      %p45 = scmp.ne.s32.totalorder %s37, %s40
      %p46 = scmp.eq.s32.totalorder %s13, 0
      %p47 = por %p45, %p46
      %p48 = scmp.ne.s32.totalorder %s37, %s40
      %p49 = scmp.eq.s32.totalorder %s18, 1
      %p50 = por %p48, %p49
      %p51 = scmp.ne.s32.totalorder %s40, %s41
      %p52 = scmp.eq.s32.totalorder %s18, 0
      %p53 = por %p51, %p52
      %p54 = scmp.ne.s32.totalorder %s40, %s41
      %p55 = scmp.eq.s32.totalorder %s19, 1
      %p56 = por %p54, %p55
      %p58 = scmp.ne.s32.totalorder %s41, %s57
      %p59 = scmp.eq.s32.totalorder %s19, 0
      %p60 = por %p58, %p59
      %s62 = sadd.s32 %s61, 1
      %p65 = scmp.eq.s32.totalorder %s13, 1
      %p66 = scmp.ne.s32.totalorder %s61, %s63
      %p67 = scmp.eq.s32.totalorder %s13, 0
      %p68 = por %p66, %p67
      %p69 = scmp.ne.s32.totalorder %s61, %s63
      %p70 = scmp.eq.s32.totalorder %s18, 1
      %p71 = por %p69, %p70
      %p72 = scmp.ne.s32.totalorder %s63, %s64
      %p73 = scmp.eq.s32.totalorder %s18, 0
      %p74 = por %p72, %p73
      %p75 = scmp.ne.s32.totalorder %s63, %s64
      %p76 = scmp.eq.s32.totalorder %s19, 1
      %p77 = por %p75, %p76
      %p79 = scmp.ne.s32.totalorder %s64, %s78
      %p80 = scmp.eq.s32.totalorder %s19, 0
      %p81 = por %p79, %p80
      %s83 = sadd.s32 %s82, 1
      %p86 = scmp.eq.s32.totalorder %s13, 1
      %p87 = scmp.ne.s32.totalorder %s82, %s84
      %p88 = scmp.eq.s32.totalorder %s13, 0
      %p89 = por %p87, %p88
      %p90 = scmp.ne.s32.totalorder %s82, %s84
      %p91 = scmp.eq.s32.totalorder %s18, 1
      %p92 = por %p90, %p91
      %p93 = scmp.ne.s32.totalorder %s84, %s85
      %p94 = scmp.eq.s32.totalorder %s18, 0
      %p95 = por %p93, %p94
      %p96 = scmp.ne.s32.totalorder %s84, %s85
      %p97 = scmp.eq.s32.totalorder %s19, 1
      %p98 = por %p96, %p97
      %p100 = scmp.ne.s32.totalorder %s85, %s99
      %p101 = scmp.eq.s32.totalorder %s19, 0
      %p102 = por %p100, %p101
      %s104 = sadd.s32 %s103, 1
      %p107 = scmp.eq.s32.totalorder %s13, 1
      %p108 = scmp.ne.s32.totalorder %s103, %s105
      %p109 = scmp.eq.s32.totalorder %s13, 0
      %p110 = por %p108, %p109
      %p111 = scmp.ne.s32.totalorder %s103, %s105
      %p112 = scmp.eq.s32.totalorder %s18, 1
      %p113 = por %p111, %p112
      %p114 = scmp.ne.s32.totalorder %s105, %s106
      %p115 = scmp.eq.s32.totalorder %s18, 0
      %p116 = por %p114, %p115
      %p117 = scmp.ne.s32.totalorder %s105, %s106
      %p118 = scmp.eq.s32.totalorder %s19, 1
      %p119 = por %p117, %p118
      %p121 = scmp.ne.s32.totalorder %s106, %s120
      %p122 = scmp.eq.s32.totalorder %s19, 0
      %p123 = por %p121, %p122
      %s124 = ssub.s32 %s20, %s32
      %s125 = ssub.s32 %s21, %s28
      %s126 = sor.u32 %s124, %s125
      %p127 = scmp.eq.s32.totalorder %s126, 0
      %s129 = sadd.s32 %s128, 1
      %s130 = scalar_select %p127, %s128, %s129
      %p133 = pneg %p127
      %p134 = scmp.eq.s32.totalorder %s13, 1
      %p135 = por %p133, %p134
      %p136 = scmp.ne.s32.totalorder %s128, %s131
      %p137 = scmp.eq.s32.totalorder %s13, 0
      %p138 = por %p136, %p137
      %p139 = scmp.ne.s32.totalorder %s128, %s131
      %p140 = scmp.eq.s32.totalorder %s18, 1
      %p141 = por %p139, %p140
      %p142 = scmp.ne.s32.totalorder %s131, %s132
      %p143 = scmp.eq.s32.totalorder %s18, 0
      %p144 = por %p142, %p143
      %p145 = scmp.ne.s32.totalorder %s131, %s132
      %p146 = scmp.eq.s32.totalorder %s19, 1
      %p147 = por %p145, %p146
      %p149 = scmp.ne.s32.totalorder %s132, %s148
      %p150 = scmp.eq.s32.totalorder %s19, 0
      %p151 = por %p149, %p150
      %p152 = scmp.le.s32.totalorder 1, %s13
      %p153 = scmp.lt.s32.totalorder %s13, 3
      %p154 = pnand %p152, %p153
      %p155 = pneg %p154
      // Predicated region
      $region9: #{tpu_custom_call.1} parent=5 // pred_check
        _
      $region10: #{tpu_custom_call.1} parent=5 // pred_check_branch
        %157 = sbr.rel (%p154) target = $region12
      $region11: #{tpu_custom_call.1} parent=5 // pred_region
        %s158 = ssub.s32 %s13, 1
        // Predicated region
        $region13: #{tpu_custom_call.1} parent=11 // pred_check
          %p159 = pneg %p74
        $region14: #{tpu_custom_call.1} parent=11 // pred_check_branch
          %161 = sbr.rel (%p159) target = $region16
        $region15: #{tpu_custom_call.1} parent=11 // pred_region
          _
        $region16: #{tpu_custom_call.1} parent=11 // pred_fallthru
          _
        // Predicated region
        $region17: #{tpu_custom_call.1} parent=11 // pred_check
          %p162 = pneg %p95
        $region18: #{tpu_custom_call.1} parent=11 // pred_check_branch
          %164 = sbr.rel (%p162) target = $region20
        $region19: #{tpu_custom_call.1} parent=11 // pred_region
          _
        $region20: #{tpu_custom_call.1} parent=11 // pred_fallthru
          _
        // Predicated region
        $region21: #{tpu_custom_call.1} parent=11 // pred_check
          %p165 = pneg %p116
        $region22: #{tpu_custom_call.1} parent=11 // pred_check_branch
          %167 = sbr.rel (%p165) target = $region24
        $region23: #{tpu_custom_call.1} parent=11 // pred_region
          _
        $region24: #{tpu_custom_call.1} parent=11 // pred_fallthru
          _
      $region12: #{tpu_custom_call.1} parent=5 // pred_fallthru
        _
      %p168 = scmp.lt.s32.totalorder %s13, 2
      // Predicated region
      $region25: #{tpu_custom_call.1} parent=5 // pred_check
        %p169 = pneg %p168
      $region26: #{tpu_custom_call.1} parent=5 // pred_check_branch
        %171 = sbr.rel (%p169) target = $region28
      $region27: #{tpu_custom_call.1} parent=5 // pred_region
        // Predicated region
        $region29: #{tpu_custom_call.1} parent=27 // pred_check
          %p172 = pneg %p47
        $region30: #{tpu_custom_call.1} parent=27 // pred_check_branch
          %174 = sbr.rel (%p172) target = $region32
        $region31: #{tpu_custom_call.1} parent=27 // pred_region
          %s175 = smul.u32 2, %s21
          %p176 = scmp.lt.s32.totalorder %s20, 1
          %s177 = scalar_select %p176, %s20, 1
          %p178 = scmp.lt.s32.totalorder %s175, 1
          %s179 = scalar_select %p178, %s175, 1
          %s180 = smul.addr %s177, 2
          %s181 = sadd.s32 %s179, %s180
          %s182 = smul.addr %s181, 8
          %s183 = scalar_lea.vmem %s0, %s182
          %s184 = smul.u32 2, %s21
        $region32: #{tpu_custom_call.1} parent=27 // pred_fallthru
          _
      $region28: #{tpu_custom_call.1} parent=5 // pred_fallthru
        _
      %p185 = scmp.le.s32.totalorder 1, %s13
      %p186 = scmp.lt.s32.totalorder %s13, 3
      %p187 = pnand %p185, %p186
      %p188 = pneg %p187
      // Predicated region
      $region33: #{tpu_custom_call.1} parent=5 // pred_check
        _
      $region34: #{tpu_custom_call.1} parent=5 // pred_check_branch
        %190 = sbr.rel (%p187) target = $region36
      $region35: #{tpu_custom_call.1} parent=5 // pred_region
        %s191 = ssub.s32 %s13, 1
        %s192 = smul.u32 2, %s23
        %p193 = scmp.lt.s32.totalorder %s22, 1
        %s194 = scalar_select %p193, %s22, 1
        %p195 = scmp.lt.s32.totalorder %s192, 1
        %s196 = scalar_select %p195, %s192, 1
        %s197 = smul.addr %s194, 2
        %s198 = sadd.s32 %s196, %s197
        %s199 = smul.addr %s198, 8
        %s200 = scalar_lea.vmem %s0, %s199
        %p201 = pneg %p53
        %p202 = pneg %p50
        %p203 = pneg %p74
        %p204 = pneg %p71
        %p205 = pneg %p95
        %p206 = pneg %p92
        %p207 = pneg %p116
        %p208 = pneg %p113
        %p209 = pneg %p144
        %p210 = pneg %p141
        %s211 = sand.u32 %s131, 1
        %s212 = scalar_lea.sflag [#allocation3], %s211
        %s213 = sand.u32 %s131, 1
        %s214 = smul.addr %s213, 4
        %s215 = scalar_lea.vmem [#allocation2], %s214
        %s216 = smul.u32 2, %s23
        %p217 = scmp.lt.s32.totalorder %s22, 1
        %s218 = scalar_select %p217, %s22, 1
        %p219 = scmp.lt.s32.totalorder %s216, 1
        %s220 = scalar_select %p219, %s216, 1
        %s221 = smul.addr %s218, 2
        %s222 = sadd.s32 %s220, %s221
        %s223 = smul.addr %s222, 8
        %s224 = scalar_lea.vmem %s0, %s223
        %s225 = smul.u32 2, %s23
        %v226 = vld [vmem:[%s224] sm:$0xff]
        %v227 = vld [vmem:[%s224 + $0x8] sm:$0xff]
        %v228 = vld [vmem:[%s1] sm:$0xff]
        %s229 = scalar_lea.vmem %s1, 8
        %v230 = vld [vmem:[%s229] sm:$0xff]
        %232 = vset.pattern.permute.xlu0 0
        %233 = vperm.xlu0 %232, %v228
        %v234 = vpop.permute.xlu0 %233
        %v236 = vmul.f32 %v226, %v234
        %v237 = vmul.f32 %v227, %v234
        %239 = vset.pattern.permute.xlu0 0
        %240 = vperm.xlu0 %239, %v230
        %v241 = vpop.permute.xlu0 %240
        %v243 = vadd.f32 %v236, %v241
        %v244 = vadd.f32 %v237, %v241
        %v245 = vmax.f32 %v243, 0.0
        %v246 = vmax.f32 %v244, 0.0
        %v247 = vld [vmem:[%s3] sm:$0xff]
        %v248 = vld [vmem:[%s3 + $0x8] sm:$0xff]
        %v249 = vld [vmem:[%s3 + $0x10] sm:$0xff]
        %v250 = vld [vmem:[%s3 + $0x18] sm:$0xff]
        %v251 = vld [vmem:[%s3 + $0x20] sm:$0xff]
        %v252 = vld [vmem:[%s3 + $0x28] sm:$0xff]
        %v253 = vld [vmem:[%s3 + $0x30] sm:$0xff]
        %v254 = vld [vmem:[%s3 + $0x38] sm:$0xff]
        %v255 = vld [vmem:[%s3 + $0x40] sm:$0xff]
        %v256 = vld [vmem:[%s3 + $0x48] sm:$0xff]
        %v257 = vld [vmem:[%s3 + $0x50] sm:$0xff]
        %v258 = vld [vmem:[%s3 + $0x58] sm:$0xff]
        %v259 = vld [vmem:[%s3 + $0x60] sm:$0xff]
        %v260 = vld [vmem:[%s3 + $0x68] sm:$0xff]
        %v261 = vld [vmem:[%s3 + $0x70] sm:$0xff]
        %v262 = vld [vmem:[%s3 + $0x78] sm:$0xff]
        %v263 = vld [vmem:[%s3 + $0x80] sm:$0xff]
        %v264 = vld [vmem:[%s3 + $0x88] sm:$0xff]
        %v265 = vld [vmem:[%s3 + $0x90] sm:$0xff]
        %v266 = vld [vmem:[%s3 + $0x98] sm:$0xff]
        %v267 = vld [vmem:[%s3 + $0xa0] sm:$0xff]
        %v268 = vld [vmem:[%s3 + $0xa8] sm:$0xff]
        %v269 = vld [vmem:[%s3 + $0xb0] sm:$0xff]
        %v270 = vld [vmem:[%s3 + $0xb8] sm:$0xff]
        %v271 = vld [vmem:[%s3 + $0xc0] sm:$0xff]
        %v272 = vld [vmem:[%s3 + $0xc8] sm:$0xff]
        %v273 = vld [vmem:[%s3 + $0xd0] sm:$0xff]
        %v274 = vld [vmem:[%s3 + $0xd8] sm:$0xff]
        %v275 = vld [vmem:[%s3 + $0xe0] sm:$0xff]
        %v276 = vld [vmem:[%s3 + $0xe8] sm:$0xff]
        %v277 = vld [vmem:[%s3 + $0xf0] sm:$0xff]
        %v278 = vld [vmem:[%s3 + $0xf8] sm:$0xff]
        %279 = vmatprep.subr.mxu0 0.0
        %280 = vmatpush1.msra.mxu0 %v247
        %281 = vmatprep.subr.mxu0 0.0
        %282 = vmatpush1.msra.mxu0 %v248
        %283 = vmatprep.subr.mxu0 0.0
        %284 = vmatpush1.msra.mxu0 %v249
        %285 = vmatprep.subr.mxu0 0.0
        %286 = vmatpush1.msra.mxu0 %v250
        %287 = vmatprep.subr.mxu0 0.0
        %288 = vmatpush1.msra.mxu0 %v251
        %289 = vmatprep.subr.mxu0 0.0
        %290 = vmatpush1.msra.mxu0 %v252
        %291 = vmatprep.subr.mxu0 0.0
        %292 = vmatpush1.msra.mxu0 %v253
        %293 = vmatprep.subr.mxu0 0.0
        %294 = vmatpush1.msra.mxu0 %v254
        %295 = vmatprep.subr.mxu0 0.0
        %296 = vmatpush1.msra.mxu0 %v255
        %297 = vmatprep.subr.mxu0 0.0
        %298 = vmatpush1.msra.mxu0 %v256
        %299 = vmatprep.subr.mxu0 0.0
        %300 = vmatpush1.msra.mxu0 %v257
        %301 = vmatprep.subr.mxu0 0.0
        %302 = vmatpush1.msra.mxu0 %v258
        %303 = vmatprep.subr.mxu0 0.0
        %304 = vmatpush1.msra.mxu0 %v259
        %305 = vmatprep.subr.mxu0 0.0
        %306 = vmatpush1.msra.mxu0 %v260
        %307 = vmatprep.subr.mxu0 0.0
        %308 = vmatpush1.msra.mxu0 %v261
        %309 = vmatprep.subr.mxu0 0.0
        %310 = vmatpush1.msra.mxu0 %v262
        %311 = vmatprep.subr.mxu0 0.0
        %312 = vmatpush1.msra.mxu0 %v263
        %313 = vmatprep.subr.mxu0 0.0
        %314 = vmatpush1.msra.mxu0 %v264
        %315 = vmatprep.subr.mxu0 0.0
        %316 = vmatpush1.msra.mxu0 %v265
        %317 = vmatprep.subr.mxu0 0.0
        %318 = vmatpush1.msra.mxu0 %v266
        %319 = vmatprep.subr.mxu0 0.0
        %320 = vmatpush1.msra.mxu0 %v267
        %321 = vmatprep.subr.mxu0 0.0
        %322 = vmatpush1.msra.mxu0 %v268
        %323 = vmatprep.subr.mxu0 0.0
        %324 = vmatpush1.msra.mxu0 %v269
        %325 = vmatprep.subr.mxu0 0.0
        %326 = vmatpush1.msra.mxu0 %v270
        %327 = vmatprep.subr.mxu0 0.0
        %328 = vmatpush1.msra.mxu0 %v271
        %329 = vmatprep.subr.mxu0 0.0
        %330 = vmatpush1.msra.mxu0 %v272
        %331 = vmatprep.subr.mxu0 0.0
        %332 = vmatpush1.msra.mxu0 %v273
        %333 = vmatprep.subr.mxu0 0.0
        %334 = vmatpush1.msra.mxu0 %v274
        %335 = vmatprep.subr.mxu0 0.0
        %336 = vmatpush1.msra.mxu0 %v275
        %337 = vmatprep.subr.mxu0 0.0
        %338 = vmatpush1.msra.mxu0 %v276
        %339 = vmatprep.subr.mxu0 0.0
        %340 = vmatpush1.msra.mxu0 %v277
        %341 = vmatprep.subr.mxu0 0.0
        %342 = vmatpush1.msra.mxu0 %v278
        %343 = vmatprep.mubr.f32.mxu0 %v246
        %344 = vmatmul.mubr.f32.gmra.mrb[0].mxu0 %v245
        %v345 = vpop.f32.mrb[0].mxu0
        %v346 = vadd.f32 0.0, %v345
        %v347 = vpop.f32.mrb[0].mxu0
        %348 = vdwg.mxu0
        %v349 = vld [vmem:[%s2] sm:$0xf]
        %vm350 = vcmask 64512
        %v352 = vsel %vm350, %v349, 0
        %354 = vmatprep.subr.mxu0 0.0
        %355 = vmatpush1.msra.mxu0 %v346
        %356 = vmatprep.subr.mxu0 0.0
        %357 = vmatpush1.msra.mxu0 0.0
        %358 = vmatprep.subr.mxu0 0.0
        %359 = vmatpush1.msra.mxu0 0.0
        %360 = vmatprep.subr.mxu0 0.0
        %361 = vmatpush1.msra.mxu0 0.0
        %362 = vmatprep.subr.mxu0 0.0
        %363 = vmatpush1.msra.mxu0 0.0
        %364 = vmatprep.subr.mxu0 0.0
        %365 = vmatpush1.msra.mxu0 0.0
        %366 = vmatprep.subr.mxu0 0.0
        %367 = vmatpush1.msra.mxu0 0.0
        %368 = vmatprep.subr.mxu0 0.0
        %369 = vmatpush1.msra.mxu0 0.0
        %370 = vmatprep.subr.mxu0 0.0
        %371 = vmatpush1.msra.mxu0 0.0
        %372 = vmatprep.subr.mxu0 0.0
        %373 = vmatpush1.msra.mxu0 0.0
        %374 = vmatprep.subr.mxu0 0.0
        %375 = vmatpush1.msra.mxu0 0.0
        %376 = vmatprep.subr.mxu0 0.0
        %377 = vmatpush1.msra.mxu0 0.0
        %378 = vmatprep.subr.mxu0 0.0
        %379 = vmatpush1.msra.mxu0 0.0
        %380 = vmatprep.subr.mxu0 0.0
        %381 = vmatpush1.msra.mxu0 0.0
        %382 = vmatprep.subr.mxu0 0.0
        %383 = vmatpush1.msra.mxu0 0.0
        %384 = vmatprep.subr.mxu0 0.0
        %385 = vmatpush1.msra.mxu0 0.0
        %386 = vmatprep.subr.mxu0 0.0
        %387 = vmatpush1.msra.mxu0 0.0
        %388 = vmatprep.subr.mxu0 0.0
        %389 = vmatpush1.msra.mxu0 0.0
        %390 = vmatprep.subr.mxu0 0.0
        %391 = vmatpush1.msra.mxu0 0.0
        %392 = vmatprep.subr.mxu0 0.0
        %393 = vmatpush1.msra.mxu0 0.0
        %394 = vmatprep.subr.mxu0 0.0
        %395 = vmatpush1.msra.mxu0 0.0
        %396 = vmatprep.subr.mxu0 0.0
        %397 = vmatpush1.msra.mxu0 0.0
        %398 = vmatprep.subr.mxu0 0.0
        %399 = vmatpush1.msra.mxu0 0.0
        %400 = vmatprep.subr.mxu0 0.0
        %401 = vmatpush1.msra.mxu0 0.0
        %402 = vmatprep.subr.mxu0 0.0
        %403 = vmatpush1.msra.mxu0 0.0
        %404 = vmatprep.subr.mxu0 0.0
        %405 = vmatpush1.msra.mxu0 0.0
        %406 = vmatprep.subr.mxu0 0.0
        %407 = vmatpush1.msra.mxu0 0.0
        %408 = vmatprep.subr.mxu0 0.0
        %409 = vmatpush1.msra.mxu0 0.0
        %410 = vmatprep.subr.mxu0 0.0
        %411 = vmatpush1.msra.mxu0 0.0
        %412 = vmatprep.subr.mxu0 0.0
        %413 = vmatpush1.msra.mxu0 0.0
        %414 = vmatprep.subr.mxu0 0.0
        %415 = vmatpush1.msra.mxu0 0.0
        %416 = vmatprep.subr.mxu0 0.0
        %417 = vmatpush1.msra.mxu0 0.0
        %418 = vmatprep.mubr.f32.mxu0 0.0
        %419 = vmatmul.mubr.f32.gmra.mrb[0].mxu0 %v352
        %v420 = vpop.f32.mrb[0].mxu0
        %v421 = vadd.f32 0.0, %v420
        %v422 = vpop.f32.mrb[0].mxu0
        %423 = vdwg.mxu0
        %vm424 = vcmask 519168
        %425 = vst.msk [vmem:[%s215] sm:$0xf] %vm424, %v421
        %s426 = sand.u32 %s131, 1
        %s427 = scalar_lea.sflag [#allocation3], %s426
        %s428 = sand.u32 %s131, 1
        %s429 = smul.addr %s428, 4
        %s430 = scalar_lea.vmem [#allocation2], %s429
        // Predicated region
        $region37: #{tpu_custom_call.1} parent=35 // pred_check
          %p431 = pneg %p141
        $region38: #{tpu_custom_call.1} parent=35 // pred_check_branch
          %433 = sbr.rel (%p431) target = $region40
        $region39: #{tpu_custom_call.1} parent=35 // pred_region
          %s435 = ssub.s32 64, 64
          %436 = vsyncadd %s427, %s435
          %s437 = sadd.s32 %s23, %s22
          %s438 = smul.addr %s437, 64
          %s439 = scalar_lea.hbm %s4, %s438
          %s441 = sshll.u32 %s430, 4
          %s442 = int_to_ptr.vmem [resolvable:$true] %s441
          %444 = dma.vmem_to_hbm [thread:$0]  %s442, 64, %s439, %s427
        $region40: #{tpu_custom_call.1} parent=35 // pred_fallthru
          _
      $region36: #{tpu_custom_call.1} parent=5 // pred_fallthru
        _
      %p445 = scmp.le.s32.totalorder 2, %s13
      // Predicated region
      $region41: #{tpu_custom_call.1} parent=5 // pred_check
        %p446 = pneg %p445
      $region42: #{tpu_custom_call.1} parent=5 // pred_check_branch
        %448 = sbr.rel (%p446) target = $region44
      $region43: #{tpu_custom_call.1} parent=5 // pred_region
        %s449 = ssub.s32 %s13, 2
        // Predicated region
        $region45: #{tpu_custom_call.1} parent=43 // pred_check
          %p450 = pneg %p147
        $region46: #{tpu_custom_call.1} parent=43 // pred_check_branch
          %452 = sbr.rel (%p450) target = $region48
        $region47: #{tpu_custom_call.1} parent=43 // pred_region
          %s453 = sand.u32 %s132, 1
          %s454 = scalar_lea.sflag [#allocation3], %s453
          %s455 = sand.u32 %s132, 1
          %s456 = smul.addr %s455, 4
          %s457 = scalar_lea.vmem [#allocation2], %s456
          %458 = dma.done %s454, 64
        $region48: #{tpu_custom_call.1} parent=43 // pred_fallthru
          _
      $region44: #{tpu_custom_call.1} parent=5 // pred_fallthru
        _
    $region6: #{tpu_custom_call.1} parent=1 // loop_footer
      %s17 = sadd.s32 1, %s13
    $region7: #{tpu_custom_call.1} parent=1 // loop_footer_branch
      %12 = sbr.rel target = $region3
    $region8: #{tpu_custom_call.1} parent=1 // loop_exit
      _
    %459 = vsyncpa [#allocation3], 1
    %s460 = scalar_lea.sflag [#allocation3], 1
    %461 = vsyncpa %s460, 1

</llo_original>
